<compile_context>
chip_gen: v5e
topology: v5e:2x2
jax: 0.10.0
libtpu: 0.0.40
codegen_flags: <defaults>
</compile_context>

<pallas_src>
import jax
import jax.numpy as jnp
from jax.experimental import pallas as pl
from jax.experimental.pallas import tpu as pltpu

HIDDEN = 256
OUT_W = 8      # narrow packed output: col 0 -> q1, col 1 -> q2, rest zero
MAX_TB = 1024  # max batch tile (working set ~6 MB at TB=1024, fits everywhere)


def qnet_kernel(x_ref, w14_ref, b14_ref, w2_ref, b2_ref, w5_ref, b5_ref,
                w36h_ref, w36g_ref, b36_ref, out_ref):
    # Activations cast to bf16 immediately before each dot so the MXU runs its
    # native bf16 x bf16 -> f32 path; bf16 weights are used directly (no upcast).
    x = x_ref[...].astype(jnp.bfloat16)

    # ---- layer 1: fc1 | fc4 fused into a single (in_dim, 512) matmul.
    hg = jnp.dot(x, w14_ref[...], preferred_element_type=jnp.float32) + b14_ref[...]
    hg = jnp.maximum(hg, 0.0)
    h = hg[:, :HIDDEN].astype(jnp.bfloat16)   # head-1 activations (lane-aligned slice)
    g = hg[:, HIDDEN:].astype(jnp.bfloat16)   # head-2 activations

    # ---- layer 2: fc2 / fc5 kept separate; per-head biases, no lane-dim concat.
    h2 = jnp.maximum(
        jnp.dot(h, w2_ref[...], preferred_element_type=jnp.float32) + b2_ref[...], 0.0)
    g2 = jnp.maximum(
        jnp.dot(g, w5_ref[...], preferred_element_type=jnp.float32) + b5_ref[...], 0.0)

    # ---- layer 3: fc3 / fc6 packed into two (256, OUT_W) halves.
    q = (jnp.dot(h2.astype(jnp.bfloat16), w36h_ref[...],
                 preferred_element_type=jnp.float32)
         + jnp.dot(g2.astype(jnp.bfloat16), w36g_ref[...],
                   preferred_element_type=jnp.float32)
         + b36_ref[...])
    out_ref[...] = q.astype(out_ref.dtype)


def _round_up(x, m):
    return ((x + m - 1) // m) * m


def vanilla_sac_qnet_forward(s, a, packed):
    """Twin-Q forward pass; returns (q1, q2) each of shape (B, 1)."""
    B, state_dim = s.shape
    action_dim = a.shape[1]
    in_dim = state_dim + action_dim

    # Single concatenated input -> one K=in_dim matmul / one input DMA stream.
    x = jnp.concatenate([s, a], axis=1)

    # Batch tile: full batch when tiny (block == full dim is always legal);
    # otherwise split so the grid has >= 2 steps (v7x has 2 TCs), capped at MAX_TB.
    if B <= 16:
        TB = B
    else:
        TB = min(MAX_TB, _round_up(pl.cdiv(B, 2), 8))
    grid = (pl.cdiv(B, TB),)

    def resident(arr):
        # Constant index map -> block fetched once, stays resident in VMEM.
        return pl.BlockSpec(arr.shape, lambda i: (0, 0))

    flops = 2 * B * (in_dim * 2 * HIDDEN + 2 * HIDDEN * HIDDEN + 2 * HIDDEN * OUT_W)
    weight_bytes = sum(int(v.size) * v.dtype.itemsize for v in packed.values())
    bytes_accessed = weight_bytes + B * (in_dim + OUT_W) * 4

    out = pl.pallas_call(
        qnet_kernel,
        out_shape=jax.ShapeDtypeStruct((B, OUT_W), jnp.float32),
        grid=grid,
        in_specs=[
            pl.BlockSpec((TB, in_dim), lambda i: (i, 0)),
            resident(packed["w14"]),
            resident(packed["b14"]),
            resident(packed["w2"]),
            resident(packed["b2"]),
            resident(packed["w5"]),
            resident(packed["b5"]),
            resident(packed["w36_h"]),
            resident(packed["w36_g"]),
            resident(packed["b36"]),
        ],
        out_specs=pl.BlockSpec((TB, OUT_W), lambda i: (i, 0)),
        compiler_params=pltpu.CompilerParams(
            dimension_semantics=("parallel",),
            vmem_limit_bytes=32 * 1024 * 1024),
        cost_estimate=pl.CostEstimate(flops=flops, transcendentals=0,
                                      bytes_accessed=bytes_accessed),
    )(x,
      packed["w14"], packed["b14"],
      packed["w2"], packed["b2"],
      packed["w5"], packed["b5"],
      packed["w36_h"], packed["w36_g"], packed["b36"])

    q1 = out[:, 0:1]
    q2 = out[:, 1:2]
    return q1, q2


def init_params(key, state_dim, action_dim):
    """Init mirroring the PyTorch module, plus packing for the fused kernel.

    fc1/fc2/fc4/fc5: default Linear init U(-1/sqrt(fan_in), 1/sqrt(fan_in)).
    fc3/fc6: weights and biases ~ U(-0.003, 0.003).
    Weights stored as (in_features, out_features) bf16; biases f32.
    Returns (raw per-layer params, packed params for the kernel).
    """
    in_dim = state_dim + action_dim
    keys = jax.random.split(key, 12)

    def lin(kw, kb, fan_in, fan_out, bound=None):
        if bound is None:
            bound = 1.0 / float(fan_in) ** 0.5
        w = jax.random.uniform(kw, (fan_in, fan_out), jnp.float32, -bound, bound)
        b = jax.random.uniform(kb, (1, fan_out), jnp.float32, -bound, bound)
        return w.astype(jnp.bfloat16), b

    w1, b1 = lin(keys[0], keys[1], in_dim, HIDDEN)
    w2, b2 = lin(keys[2], keys[3], HIDDEN, HIDDEN)
    w3, b3 = lin(keys[4], keys[5], HIDDEN, 1, bound=0.003)
    w4, b4 = lin(keys[6], keys[7], in_dim, HIDDEN)
    w5, b5 = lin(keys[8], keys[9], HIDDEN, HIDDEN)
    w6, b6 = lin(keys[10], keys[11], HIDDEN, 1, bound=0.003)

    raw = dict(w1=w1, b1=b1, w2=w2, b2=b2, w3=w3, b3=b3,
               w4=w4, b4=b4, w5=w5, b5=b5, w6=w6, b6=b6)

    # ---- pack for the fused kernel ----
    w14 = jnp.concatenate([w1, w4], axis=1)                 # (in_dim, 512) bf16
    w36_h = jnp.zeros((HIDDEN, OUT_W), jnp.bfloat16).at[:, 0:1].set(w3)  # col 0 <- fc3
    w36_g = jnp.zeros((HIDDEN, OUT_W), jnp.bfloat16).at[:, 1:2].set(w6)  # col 1 <- fc6
    b36 = jnp.zeros((1, OUT_W), jnp.float32)
    b36 = b36.at[0, 0].set(b3[0, 0]).at[0, 1].set(b6[0, 0])

    packed = dict(
        w14=w14,                                   # (in_dim, 512) bf16
        b14=jnp.concatenate([b1, b4], axis=1),     # (1, 512) f32
        w2=w2, b2=b2,                              # (256, 256) bf16 / (1, 256) f32
        w5=w5, b5=b5,
        w36_h=w36_h, w36_g=w36_g,                  # (256, 8) bf16 each
        b36=b36,                                   # (1, 8) f32
    )
    return raw, packed


def reference_forward_f32(s, a, p):
    """Pure-JAX f32 reference mirroring the PyTorch forward (weights upcast)."""
    f32 = lambda w: w.astype(jnp.float32)
    x = jnp.concatenate([s, a], axis=1)
    h = jax.nn.relu(x @ f32(p["w1"]) + p["b1"])
    h = jax.nn.relu(h @ f32(p["w2"]) + p["b2"])
    q1 = h @ f32(p["w3"]) + p["b3"]
    g = jax.nn.relu(x @ f32(p["w4"]) + p["b4"])
    g = jax.nn.relu(g @ f32(p["w5"]) + p["b5"])
    q2 = g @ f32(p["w6"]) + p["b6"]
    return q1, q2


def reference_forward_bf16(s, a, p):
    """Reference emulating the kernel's bf16-operand / f32-accumulate math."""
    bf = lambda v: v.astype(jnp.bfloat16)
    dot = lambda u, w: jnp.dot(bf(u), w, preferred_element_type=jnp.float32)
    x = jnp.concatenate([s, a], axis=1)
    h = jax.nn.relu(dot(x, p["w1"]) + p["b1"])
    h = jax.nn.relu(dot(h, p["w2"]) + p["b2"])
    q1 = dot(h, p["w3"]) + p["b3"]
    g = jax.nn.relu(dot(x, p["w4"]) + p["b4"])
    g = jax.nn.relu(dot(g, p["w5"]) + p["b5"])
    q2 = dot(g, p["w6"]) + p["b6"]
    return q1, q2


if __name__ == "__main__":
    state_dim, action_dim, batch = 12, 4, 8

    key = jax.random.PRNGKey(0)
    k_s, k_a, k_p = jax.random.split(key, 3)
    s = jax.random.normal(k_s, (batch, state_dim), jnp.float32)
    a = jax.random.normal(k_a, (batch, action_dim), jnp.float32)
    raw_params, packed_params = init_params(k_p, state_dim, action_dim)

    q1, q2 = vanilla_sac_qnet_forward(s, a, packed_params)
    q1 = jax.block_until_ready(q1)
    q2 = jax.block_until_ready(q2)
    assert q1.shape == (batch, 1) and q2.shape == (batch, 1)

    # Tight check against a reference using the same bf16-operand math.
    r1b, r2b = reference_forward_bf16(s, a, raw_params)
    assert jnp.allclose(q1, r1b, atol=1e-4, rtol=1e-3)
    assert jnp.allclose(q2, r2b, atol=1e-4, rtol=1e-3)

    # Loose sanity check against the full-f32 module semantics
    # (bf16 MXU operands change numerics slightly, per perf review).
    r1f, r2f = reference_forward_f32(s, a, raw_params)
    assert jnp.allclose(q1, r1f, atol=2e-2)
    assert jnp.allclose(q2, r2f, atol=2e-2)

    print("KERNEL_OK")
</pallas_src>

<mosaic_0001>
module attributes {stable_mosaic.version = 11 : i64} {
  func.func @qnet_kernel(%arg0: i32, %arg1: memref<8x16xf32, #tpu.memory_space<vmem>>, %arg2: memref<16x512xbf16, #tpu.memory_space<vmem>>, %arg3: memref<1x512xf32, #tpu.memory_space<vmem>>, %arg4: memref<256x256xbf16, #tpu.memory_space<vmem>>, %arg5: memref<1x256xf32, #tpu.memory_space<vmem>>, %arg6: memref<256x256xbf16, #tpu.memory_space<vmem>>, %arg7: memref<1x256xf32, #tpu.memory_space<vmem>>, %arg8: memref<256x8xbf16, #tpu.memory_space<vmem>>, %arg9: memref<256x8xbf16, #tpu.memory_space<vmem>>, %arg10: memref<1x8xf32, #tpu.memory_space<vmem>>, %arg11: memref<8x8xf32, #tpu.memory_space<vmem>>) attributes {dimension_semantics = [#tpu.dimension_semantics<parallel>], iteration_bounds = array<i64: 1>, scalar_prefetch = 0 : i64, scratch_operands = 0 : i64, tpu.core_type = #tpu.core_type<tc>, window_params = [{transform_indices = @transform_0, window_bounds = array<i64: 8, 16>}, {pipeline_mode = #tpu.pipeline_mode<synchronous>, transform_indices = @transform_1, window_bounds = array<i64: 16, 512>}, {pipeline_mode = #tpu.pipeline_mode<synchronous>, transform_indices = @transform_2, window_bounds = array<i64: 1, 512>}, {pipeline_mode = #tpu.pipeline_mode<synchronous>, transform_indices = @transform_3, window_bounds = array<i64: 256, 256>}, {pipeline_mode = #tpu.pipeline_mode<synchronous>, transform_indices = @transform_4, window_bounds = array<i64: 1, 256>}, {pipeline_mode = #tpu.pipeline_mode<synchronous>, transform_indices = @transform_5, window_bounds = array<i64: 256, 256>}, {pipeline_mode = #tpu.pipeline_mode<synchronous>, transform_indices = @transform_6, window_bounds = array<i64: 1, 256>}, {pipeline_mode = #tpu.pipeline_mode<synchronous>, transform_indices = @transform_7, window_bounds = array<i64: 256, 8>}, {pipeline_mode = #tpu.pipeline_mode<synchronous>, transform_indices = @transform_8, window_bounds = array<i64: 256, 8>}, {pipeline_mode = #tpu.pipeline_mode<synchronous>, transform_indices = @transform_9, window_bounds = array<i64: 1, 8>}, {transform_indices = @transform_10, window_bounds = array<i64: 8, 8>}]} {
    %c0 = arith.constant 0 : index
    %c0_0 = arith.constant 0 : index
    %0 = vector.load %arg1[%c0, %c0_0] : memref<8x16xf32, #tpu.memory_space<vmem>>, vector<8x16xf32>
    %1 = arith.truncf %0 : vector<8x16xf32> to vector<8x16xbf16>
    %c0_1 = arith.constant 0 : index
    %c0_2 = arith.constant 0 : index
    %2 = vector.load %arg2[%c0_1, %c0_2] : memref<16x512xbf16, #tpu.memory_space<vmem>>, vector<16x512xbf16>
    %cst = arith.constant dense<0.000000e+00> : vector<8x512xf32>
    %3 = tpu.matmul %1, %2, %cst {dimension_numbers = #tpu.dot_dimension_numbers<[1], [0], [0], [1], [0, 0, 1, 1], [], []>} : vector<8x16xbf16>, vector<16x512xbf16>, vector<8x512xf32> -> vector<8x512xf32>
    %c0_3 = arith.constant 0 : index
    %c0_4 = arith.constant 0 : index
    %4 = vector.load %arg3[%c0_3, %c0_4] : memref<1x512xf32, #tpu.memory_space<vmem>>, vector<1x512xf32>
    %5 = vector.broadcast %4 : vector<1x512xf32> to vector<8x512xf32>
    %6 = arith.addf %3, %5 : vector<8x512xf32>
    %cst_5 = arith.constant 0.000000e+00 : f32
    %7 = vector.broadcast %cst_5 : f32 to vector<8x512xf32>
    %8 = arith.maximumf %6, %7 : vector<8x512xf32>
    %9 = vector.extract_strided_slice %8 {offsets = [0, 0], sizes = [8, 256], strides = [1, 1]} : vector<8x512xf32> to vector<8x256xf32>
    %10 = arith.truncf %9 : vector<8x256xf32> to vector<8x256xbf16>
    %11 = vector.extract_strided_slice %8 {offsets = [0, 256], sizes = [8, 256], strides = [1, 1]} : vector<8x512xf32> to vector<8x256xf32>
    %12 = arith.truncf %11 : vector<8x256xf32> to vector<8x256xbf16>
    %c0_6 = arith.constant 0 : index
    %c0_7 = arith.constant 0 : index
    %13 = vector.load %arg4[%c0_6, %c0_7] : memref<256x256xbf16, #tpu.memory_space<vmem>>, vector<256x256xbf16>
    %cst_8 = arith.constant dense<0.000000e+00> : vector<8x256xf32>
    %14 = tpu.matmul %10, %13, %cst_8 {dimension_numbers = #tpu.dot_dimension_numbers<[1], [0], [0], [1], [0, 0, 1, 1], [], []>} : vector<8x256xbf16>, vector<256x256xbf16>, vector<8x256xf32> -> vector<8x256xf32>
    %c0_9 = arith.constant 0 : index
    %c0_10 = arith.constant 0 : index
    %15 = vector.load %arg5[%c0_9, %c0_10] : memref<1x256xf32, #tpu.memory_space<vmem>>, vector<1x256xf32>
    %16 = vector.broadcast %15 : vector<1x256xf32> to vector<8x256xf32>
    %17 = arith.addf %14, %16 : vector<8x256xf32>
    %cst_11 = arith.constant 0.000000e+00 : f32
    %18 = vector.broadcast %cst_11 : f32 to vector<8x256xf32>
    %19 = arith.maximumf %17, %18 : vector<8x256xf32>
    %c0_12 = arith.constant 0 : index
    %c0_13 = arith.constant 0 : index
    %20 = vector.load %arg6[%c0_12, %c0_13] : memref<256x256xbf16, #tpu.memory_space<vmem>>, vector<256x256xbf16>
    %cst_14 = arith.constant dense<0.000000e+00> : vector<8x256xf32>
    %21 = tpu.matmul %12, %20, %cst_14 {dimension_numbers = #tpu.dot_dimension_numbers<[1], [0], [0], [1], [0, 0, 1, 1], [], []>} : vector<8x256xbf16>, vector<256x256xbf16>, vector<8x256xf32> -> vector<8x256xf32>
    %c0_15 = arith.constant 0 : index
    %c0_16 = arith.constant 0 : index
    %22 = vector.load %arg7[%c0_15, %c0_16] : memref<1x256xf32, #tpu.memory_space<vmem>>, vector<1x256xf32>
    %23 = vector.broadcast %22 : vector<1x256xf32> to vector<8x256xf32>
    %24 = arith.addf %21, %23 : vector<8x256xf32>
    %cst_17 = arith.constant 0.000000e+00 : f32
    %25 = vector.broadcast %cst_17 : f32 to vector<8x256xf32>
    %26 = arith.maximumf %24, %25 : vector<8x256xf32>
    %27 = arith.truncf %19 : vector<8x256xf32> to vector<8x256xbf16>
    %c0_18 = arith.constant 0 : index
    %c0_19 = arith.constant 0 : index
    %28 = vector.load %arg8[%c0_18, %c0_19] : memref<256x8xbf16, #tpu.memory_space<vmem>>, vector<256x8xbf16>
    %cst_20 = arith.constant dense<0.000000e+00> : vector<8x8xf32>
    %29 = tpu.matmul %27, %28, %cst_20 {dimension_numbers = #tpu.dot_dimension_numbers<[1], [0], [0], [1], [0, 0, 1, 1], [], []>} : vector<8x256xbf16>, vector<256x8xbf16>, vector<8x8xf32> -> vector<8x8xf32>
    %30 = arith.truncf %26 : vector<8x256xf32> to vector<8x256xbf16>
    %c0_21 = arith.constant 0 : index
    %c0_22 = arith.constant 0 : index
    %31 = vector.load %arg9[%c0_21, %c0_22] : memref<256x8xbf16, #tpu.memory_space<vmem>>, vector<256x8xbf16>
    %cst_23 = arith.constant dense<0.000000e+00> : vector<8x8xf32>
    %32 = tpu.matmul %30, %31, %cst_23 {dimension_numbers = #tpu.dot_dimension_numbers<[1], [0], [0], [1], [0, 0, 1, 1], [], []>} : vector<8x256xbf16>, vector<256x8xbf16>, vector<8x8xf32> -> vector<8x8xf32>
    %33 = arith.addf %29, %32 : vector<8x8xf32>
    %c0_24 = arith.constant 0 : index
    %c0_25 = arith.constant 0 : index
    %34 = vector.load %arg10[%c0_24, %c0_25] : memref<1x8xf32, #tpu.memory_space<vmem>>, vector<1x8xf32>
    %35 = vector.broadcast %34 : vector<1x8xf32> to vector<8x8xf32>
    %36 = arith.addf %33, %35 : vector<8x8xf32>
    %c0_26 = arith.constant 0 : index
    %c0_27 = arith.constant 0 : index
    %37 = vector.load %arg11[%c0_26, %c0_27] : memref<8x8xf32, #tpu.memory_space<vmem>>, vector<8x8xf32>
    tpu.vector_store %arg11[%c0_26, %c0_27], %36 {strides = array<i32>} : memref<8x8xf32, #tpu.memory_space<vmem>>, vector<8x8xf32>,
    return
  }
  func.func @transform_0(%arg0: i32) -> (i32, i32) {
    %c0_i32 = arith.constant 0 : i32
    %c0_i32_0 = arith.constant 0 : i32
    return %arg0, %c0_i32 : i32, i32
  }
  func.func @transform_1(%arg0: i32) -> (i32, i32) {
    %c0_i32 = arith.constant 0 : i32
    %c0_i32_0 = arith.constant 0 : i32
    %c0_i32_1 = arith.constant 0 : i32
    return %c0_i32, %c0_i32_0 : i32, i32
  }
  func.func @transform_2(%arg0: i32) -> (i32, i32) {
    %c0_i32 = arith.constant 0 : i32
    %c0_i32_0 = arith.constant 0 : i32
    %c0_i32_1 = arith.constant 0 : i32
    return %c0_i32, %c0_i32_0 : i32, i32
  }
  func.func @transform_3(%arg0: i32) -> (i32, i32) {
    %c0_i32 = arith.constant 0 : i32
    %c0_i32_0 = arith.constant 0 : i32
    %c0_i32_1 = arith.constant 0 : i32
    return %c0_i32, %c0_i32_0 : i32, i32
  }
  func.func @transform_4(%arg0: i32) -> (i32, i32) {
    %c0_i32 = arith.constant 0 : i32
    %c0_i32_0 = arith.constant 0 : i32
    %c0_i32_1 = arith.constant 0 : i32
    return %c0_i32, %c0_i32_0 : i32, i32
  }
  func.func @transform_5(%arg0: i32) -> (i32, i32) {
    %c0_i32 = arith.constant 0 : i32
    %c0_i32_0 = arith.constant 0 : i32
    %c0_i32_1 = arith.constant 0 : i32
    return %c0_i32, %c0_i32_0 : i32, i32
  }
  func.func @transform_6(%arg0: i32) -> (i32, i32) {
    %c0_i32 = arith.constant 0 : i32
    %c0_i32_0 = arith.constant 0 : i32
    %c0_i32_1 = arith.constant 0 : i32
    return %c0_i32, %c0_i32_0 : i32, i32
  }
  func.func @transform_7(%arg0: i32) -> (i32, i32) {
    %c0_i32 = arith.constant 0 : i32
    %c0_i32_0 = arith.constant 0 : i32
    %c0_i32_1 = arith.constant 0 : i32
    return %c0_i32, %c0_i32_0 : i32, i32
  }
  func.func @transform_8(%arg0: i32) -> (i32, i32) {
    %c0_i32 = arith.constant 0 : i32
    %c0_i32_0 = arith.constant 0 : i32
    %c0_i32_1 = arith.constant 0 : i32
    return %c0_i32, %c0_i32_0 : i32, i32
  }
  func.func @transform_9(%arg0: i32) -> (i32, i32) {
    %c0_i32 = arith.constant 0 : i32
    %c0_i32_0 = arith.constant 0 : i32
    %c0_i32_1 = arith.constant 0 : i32
    return %c0_i32, %c0_i32_0 : i32, i32
  }
  func.func @transform_10(%arg0: i32) -> (i32, i32) {
    %c0_i32 = arith.constant 0 : i32
    %c0_i32_0 = arith.constant 0 : i32
    return %arg0, %c0_i32 : i32, i32
  }
}

</mosaic_0001>

<llo_original>
// kernel: tpu_custom_call.1
$region0: #{tpu_custom_call.1}
  #allocation0 [shape = 'u32[]', space=smem, size = 0x4, offset = 0x4, fixed_abs, tag = 'smem constant byte address 0x4 - core index']
  #allocation1 [shape = 'u32[72,128]{1,0:T(1,128)}', space=vmem, size = 0x9000, scoped, tag = 'internal scratch']
  %s0 = inlined_call_operand.vmem [shape: f32[8,16], index: 0, kind: input, shape index: {}]
  %s1 = inlined_call_operand.hbm [shape: bf16[16,512], index: 1, kind: input, shape index: {}]
  %s2 = inlined_call_operand.hbm [shape: f32[1,512], index: 2, kind: input, shape index: {}]
  %s3 = inlined_call_operand.vmem [shape: bf16[256,256], index: 3, kind: input, shape index: {}]
  %s4 = inlined_call_operand.vmem [shape: f32[1,256], index: 4, kind: input, shape index: {}]
  %s5 = inlined_call_operand.hbm [shape: bf16[256,256], index: 5, kind: input, shape index: {}]
  %s6 = inlined_call_operand.vmem [shape: f32[1,256], index: 6, kind: input, shape index: {}]
  %s7 = inlined_call_operand.vmem [shape: bf16[256,8], index: 7, kind: input, shape index: {}]
  %s8 = inlined_call_operand.vmem [shape: bf16[256,8], index: 8, kind: input, shape index: {}]
  %s9 = inlined_call_operand.vmem [shape: f32[1,8], index: 9, kind: input, shape index: {}]
  %s10 = inlined_call_operand.hbm [shape: f32[8,8], index: 10, kind: output, shape index: {}]
  %s11 = sld [smem:[#allocation0]]
  $region62: #{tpu_custom_call.1} parent=0
    _
  %s13 = ssub.s32 1, %s11
  %s14 = scalar_select 0, %s13, %s11
  $region1: #{tpu_custom_call.1} parent=0
    #allocation2 [shape = 'u8[16384]{0}', space=vmem, size = 0x4000, scoped, tag = 'input window, operand 1, single buffered']
    #allocation3 [shape = 's32[1]{0}', space=sflag, size = 0x4, scoped, tag = 'scoped memory for tpu_custom_call.1']
    #allocation4 [shape = 's32[1]{0}', space=sflag, size = 0x4, scoped, tag = 'scoped memory for tpu_custom_call.1']
    #allocation5 [shape = 'u8[2048]{0}', space=vmem, size = 0x800, scoped, tag = 'input window, operand 2, single buffered']
    #allocation6 [shape = 's32[1]{0}', space=sflag, size = 0x4, scoped, tag = 'scoped memory for tpu_custom_call.1']
    #allocation7 [shape = 'u8[131072]{0}', space=vmem, size = 0x20000, scoped, tag = 'input window, operand 5, single buffered']
    #allocation8 [shape = 'u8[4096]{0}', space=vmem, size = 0x1000, scoped, tag = 'output window, operand 0, single buffered']
    %15 = vsyncpa [#allocation3], 0
    %16 = vsyncpa [#allocation6], 0
    %17 = vsyncpa [#allocation4], 0
    // Predicated region
    $region2: #{tpu_custom_call.1} parent=1 // pred_check
      _
    $region3: #{tpu_custom_call.1} parent=1 // pred_check_branch
      %19 = sbr.rel (0) target = $region5
    $region4: #{tpu_custom_call.1} parent=1 // pred_region
      _
    $region5: #{tpu_custom_call.1} parent=1 // pred_fallthru
      _
    // Predicated region
    $region6: #{tpu_custom_call.1} parent=1 // pred_check
      _
    $region7: #{tpu_custom_call.1} parent=1 // pred_check_branch
      %21 = sbr.rel (0) target = $region9
    $region8: #{tpu_custom_call.1} parent=1 // pred_region
      %23 = vsyncadd [#allocation3], 0
      %s24 = sshll.u32 %s1, 4
      %s25 = int_to_ptr.hbm [resolvable:$true] %s24
      %s26 = sshll.u32 [#allocation2], 4
      %s27 = int_to_ptr.vmem [resolvable:$true] %s26
      %32 = dma.hbm_to_vmem [thread:$0]  %s25, 512, %s27, [#allocation3], 256, 256, 16
    $region9: #{tpu_custom_call.1} parent=1 // pred_fallthru
      _
    // Predicated region
    $region10: #{tpu_custom_call.1} parent=1 // pred_check
      _
    $region11: #{tpu_custom_call.1} parent=1 // pred_check_branch
      %34 = sbr.rel (0) target = $region13
    $region12: #{tpu_custom_call.1} parent=1 // pred_region
      %36 = vsyncadd [#allocation6], 0
      %s38 = sshll.u32 %s2, 4
      %s39 = int_to_ptr.hbm [resolvable:$true] %s38
      %s40 = sshll.u32 [#allocation5], 4
      %s41 = int_to_ptr.vmem [resolvable:$true] %s40
      %43 = dma.hbm_to_vmem [thread:$0]  %s39, 64, %s41, [#allocation6]
    $region13: #{tpu_custom_call.1} parent=1 // pred_fallthru
      _
    // Predicated region
    $region14: #{tpu_custom_call.1} parent=1 // pred_check
      _
    $region15: #{tpu_custom_call.1} parent=1 // pred_check_branch
      %45 = sbr.rel (0) target = $region17
    $region16: #{tpu_custom_call.1} parent=1 // pred_region
      _
    $region17: #{tpu_custom_call.1} parent=1 // pred_fallthru
      _
    // Predicated region
    $region18: #{tpu_custom_call.1} parent=1 // pred_check
      _
    $region19: #{tpu_custom_call.1} parent=1 // pred_check_branch
      %47 = sbr.rel (0) target = $region21
    $region20: #{tpu_custom_call.1} parent=1 // pred_region
      _
    $region21: #{tpu_custom_call.1} parent=1 // pred_fallthru
      _
    // Predicated region
    $region22: #{tpu_custom_call.1} parent=1 // pred_check
      _
    $region23: #{tpu_custom_call.1} parent=1 // pred_check_branch
      %49 = sbr.rel (0) target = $region25
    $region24: #{tpu_custom_call.1} parent=1 // pred_region
      %51 = vsyncadd [#allocation6], 0
      %s52 = sshll.u32 %s5, 4
      %s53 = int_to_ptr.hbm [resolvable:$true] %s52
      %s54 = sshll.u32 [#allocation7], 4
      %s55 = int_to_ptr.vmem [resolvable:$true] %s54
      %60 = dma.hbm_to_vmem [thread:$0]  %s53, 4096, %s55, [#allocation6], 128, 128, 8
    $region25: #{tpu_custom_call.1} parent=1 // pred_fallthru
      _
    // Predicated region
    $region26: #{tpu_custom_call.1} parent=1 // pred_check
      _
    $region27: #{tpu_custom_call.1} parent=1 // pred_check_branch
      %62 = sbr.rel (0) target = $region29
    $region28: #{tpu_custom_call.1} parent=1 // pred_region
      _
    $region29: #{tpu_custom_call.1} parent=1 // pred_fallthru
      _
    // Predicated region
    $region30: #{tpu_custom_call.1} parent=1 // pred_check
      _
    $region31: #{tpu_custom_call.1} parent=1 // pred_check_branch
      %64 = sbr.rel (0) target = $region33
    $region32: #{tpu_custom_call.1} parent=1 // pred_region
      _
    $region33: #{tpu_custom_call.1} parent=1 // pred_fallthru
      _
    // Predicated region
    $region34: #{tpu_custom_call.1} parent=1 // pred_check
      _
    $region35: #{tpu_custom_call.1} parent=1 // pred_check_branch
      %66 = sbr.rel (0) target = $region37
    $region36: #{tpu_custom_call.1} parent=1 // pred_region
      _
    $region37: #{tpu_custom_call.1} parent=1 // pred_fallthru
      _
    // Predicated region
    $region38: #{tpu_custom_call.1} parent=1 // pred_check
      _
    $region39: #{tpu_custom_call.1} parent=1 // pred_check_branch
      %68 = sbr.rel (0) target = $region41
    $region40: #{tpu_custom_call.1} parent=1 // pred_region
      _
    $region41: #{tpu_custom_call.1} parent=1 // pred_fallthru
      _
    // Predicated region
    $region42: #{tpu_custom_call.1} parent=1 // pred_check
      _
    $region43: #{tpu_custom_call.1} parent=1 // pred_check_branch
      %70 = sbr.rel (0) target = $region45
    $region44: #{tpu_custom_call.1} parent=1 // pred_region
      %72 = dma.done [#allocation3], 512
    $region45: #{tpu_custom_call.1} parent=1 // pred_fallthru
      _
    // Predicated region
    $region46: #{tpu_custom_call.1} parent=1 // pred_check
      _
    $region47: #{tpu_custom_call.1} parent=1 // pred_check_branch
      %74 = sbr.rel (0) target = $region49
    $region48: #{tpu_custom_call.1} parent=1 // pred_region
      %76 = dma.done [#allocation6], 64
    $region49: #{tpu_custom_call.1} parent=1 // pred_fallthru
      _
    // Predicated region
    $region50: #{tpu_custom_call.1} parent=1 // pred_check
      _
    $region51: #{tpu_custom_call.1} parent=1 // pred_check_branch
      %78 = sbr.rel (0) target = $region53
    $region52: #{tpu_custom_call.1} parent=1 // pred_region
      %80 = dma.done [#allocation6], 4096
    $region53: #{tpu_custom_call.1} parent=1 // pred_fallthru
      _
    %v82 = vld [vmem:[%s0] sm:$0xff]
    %v83 = vpack.c.bf16 %v82, %v82
    %v84 = vld [vmem:[#allocation2] sm:$0xff]
    %v85 = vld [vmem:[#allocation2 + $0x8] sm:$0xff]
    %v86 = vld [vmem:[#allocation2 + $0x10] sm:$0xff]
    %v87 = vld [vmem:[#allocation2 + $0x18] sm:$0xff]
    %v88 = vld [vmem:[#allocation5] sm:$0xf]
    %v90 = vperm.slane %v88, 0
    %v91 = vperm.slane %v88, 1
    %v92 = vperm.slane %v88, 2
    %v93 = vperm.slane %v88, 3
    %v102 = vunpack.c.l.b16 %v84
    %v103 = vunpack.c.h.b16 %v84
    %v104 = vunpack.c.l.b16 %v85
    %v105 = vunpack.c.h.b16 %v85
    %v106 = vunpack.c.l.b16 %v86
    %v107 = vunpack.c.h.b16 %v86
    %v108 = vunpack.c.l.b16 %v87
    %v109 = vunpack.c.h.b16 %v87
    %v110 = vpack.c.b16 %v106, %v102
    %v111 = vpack.c.b16 %v107, %v103
    %v112 = vpack.c.b16 %v108, %v104
    %v113 = vpack.c.b16 %v109, %v105
    %vm118 = vcmask 130048
    %v120 = vsel %vm118, %v83, 0
    %122 = vmatpush.bf16.msra.mxu0 0
    %123 = vmatpush.bf16.msra.mxu0 0
    %124 = vmatpush.bf16.msra.mxu0 0
    %125 = vmatpush.bf16.msra.mxu0 0
    %126 = vmatpush.bf16.msra.mxu0 0
    %127 = vmatpush.bf16.msra.mxu0 0
    %128 = vmatpush.bf16.msra.mxu0 0
    %129 = vmatpush.bf16.msra.mxu0 %v110
    %130 = vmatmul.bf16.gmra.mxu0 %v120
    %v131 = vpop.f32.mrf.mxu0
    %v132 = vadd.f32 %v90, %v131
    %v133 = vpop.f32.mrf.mxu0
    %134 = vdwg.mxu0
    %135 = vmatpush.bf16.msra.mxu0 0
    %136 = vmatpush.bf16.msra.mxu0 0
    %137 = vmatpush.bf16.msra.mxu0 0
    %138 = vmatpush.bf16.msra.mxu0 0
    %139 = vmatpush.bf16.msra.mxu0 0
    %140 = vmatpush.bf16.msra.mxu0 0
    %141 = vmatpush.bf16.msra.mxu0 0
    %142 = vmatpush.bf16.msra.mxu0 %v111
    %143 = vmatmul.bf16.gmra.mxu0 %v120
    %v144 = vpop.f32.mrf.mxu0
    %v145 = vadd.f32 %v91, %v144
    %v146 = vpop.f32.mrf.mxu0
    %147 = vdwg.mxu0
    %148 = vmatpush.bf16.msra.mxu0 0
    %149 = vmatpush.bf16.msra.mxu0 0
    %150 = vmatpush.bf16.msra.mxu0 0
    %151 = vmatpush.bf16.msra.mxu0 0
    %152 = vmatpush.bf16.msra.mxu0 0
    %153 = vmatpush.bf16.msra.mxu0 0
    %154 = vmatpush.bf16.msra.mxu0 0
    %155 = vmatpush.bf16.msra.mxu0 %v112
    %156 = vmatmul.bf16.gmra.mxu0 %v120
    %v157 = vpop.f32.mrf.mxu0
    %v158 = vadd.f32 %v92, %v157
    %v159 = vpop.f32.mrf.mxu0
    %160 = vdwg.mxu0
    %161 = vmatpush.bf16.msra.mxu0 0
    %162 = vmatpush.bf16.msra.mxu0 0
    %163 = vmatpush.bf16.msra.mxu0 0
    %164 = vmatpush.bf16.msra.mxu0 0
    %165 = vmatpush.bf16.msra.mxu0 0
    %166 = vmatpush.bf16.msra.mxu0 0
    %167 = vmatpush.bf16.msra.mxu0 0
    %168 = vmatpush.bf16.msra.mxu0 %v113
    %169 = vmatmul.bf16.gmra.mxu0 %v120
    %v170 = vpop.f32.mrf.mxu0
    %v171 = vadd.f32 %v93, %v170
    %v172 = vpop.f32.mrf.mxu0
    %173 = vdwg.mxu0
    %v174 = vmax.f32 %v132, 0.0
    %v175 = vmax.f32 %v145, 0.0
    %v176 = vmax.f32 %v158, 0.0
    %v177 = vmax.f32 %v171, 0.0
    %v178 = vpack.c.bf16 %v174, %v174
    %v179 = vpack.c.bf16 %v175, %v175
    %v180 = vpack.c.bf16 %v176, %v176
    %v181 = vpack.c.bf16 %v177, %v177
    %v182 = vld [vmem:[%s3] sm:$0xff]
    %v183 = vld [vmem:[%s3 + $0x8] sm:$0xff]
    %v184 = vld [vmem:[%s3 + $0x10] sm:$0xff]
    %v185 = vld [vmem:[%s3 + $0x18] sm:$0xff]
    %v186 = vld [vmem:[%s3 + $0x20] sm:$0xff]
    %v187 = vld [vmem:[%s3 + $0x28] sm:$0xff]
    %v188 = vld [vmem:[%s3 + $0x30] sm:$0xff]
    %v189 = vld [vmem:[%s3 + $0x38] sm:$0xff]
    %v190 = vld [vmem:[%s3 + $0x40] sm:$0xff]
    %v191 = vld [vmem:[%s3 + $0x48] sm:$0xff]
    %v192 = vld [vmem:[%s3 + $0x50] sm:$0xff]
    %v193 = vld [vmem:[%s3 + $0x58] sm:$0xff]
    %v194 = vld [vmem:[%s3 + $0x60] sm:$0xff]
    %v195 = vld [vmem:[%s3 + $0x68] sm:$0xff]
    %v196 = vld [vmem:[%s3 + $0x70] sm:$0xff]
    %v197 = vld [vmem:[%s3 + $0x78] sm:$0xff]
    %v198 = vld [vmem:[%s3 + $0x80] sm:$0xff]
    %v199 = vld [vmem:[%s3 + $0x88] sm:$0xff]
    %v200 = vld [vmem:[%s3 + $0x90] sm:$0xff]
    %v201 = vld [vmem:[%s3 + $0x98] sm:$0xff]
    %v202 = vld [vmem:[%s3 + $0xa0] sm:$0xff]
    %v203 = vld [vmem:[%s3 + $0xa8] sm:$0xff]
    %v204 = vld [vmem:[%s3 + $0xb0] sm:$0xff]
    %v205 = vld [vmem:[%s3 + $0xb8] sm:$0xff]
    %v206 = vld [vmem:[%s3 + $0xc0] sm:$0xff]
    %v207 = vld [vmem:[%s3 + $0xc8] sm:$0xff]
    %v208 = vld [vmem:[%s3 + $0xd0] sm:$0xff]
    %v209 = vld [vmem:[%s3 + $0xd8] sm:$0xff]
    %v210 = vld [vmem:[%s3 + $0xe0] sm:$0xff]
    %v211 = vld [vmem:[%s3 + $0xe8] sm:$0xff]
    %v212 = vld [vmem:[%s3 + $0xf0] sm:$0xff]
    %v213 = vld [vmem:[%s3 + $0xf8] sm:$0xff]
    %v214 = vld [vmem:[%s4] sm:$0x3]
    %v216 = vperm.slane %v214, 0
    %v217 = vperm.slane %v214, 1
    %v252 = vunpack.c.l.b16 %v182
    %v253 = vunpack.c.h.b16 %v182
    %v254 = vunpack.c.l.b16 %v183
    %v255 = vunpack.c.h.b16 %v183
    %v256 = vunpack.c.l.b16 %v184
    %v257 = vunpack.c.h.b16 %v184
    %v258 = vunpack.c.l.b16 %v185
    %v259 = vunpack.c.h.b16 %v185
    %v260 = vunpack.c.l.b16 %v186
    %v261 = vunpack.c.h.b16 %v186
    %v262 = vunpack.c.l.b16 %v187
    %v263 = vunpack.c.h.b16 %v187
    %v264 = vunpack.c.l.b16 %v188
    %v265 = vunpack.c.h.b16 %v188
    %v266 = vunpack.c.l.b16 %v189
    %v267 = vunpack.c.h.b16 %v189
    %v268 = vunpack.c.l.b16 %v190
    %v269 = vunpack.c.h.b16 %v190
    %v270 = vunpack.c.l.b16 %v191
    %v271 = vunpack.c.h.b16 %v191
    %v272 = vunpack.c.l.b16 %v192
    %v273 = vunpack.c.h.b16 %v192
    %v274 = vunpack.c.l.b16 %v193
    %v275 = vunpack.c.h.b16 %v193
    %v276 = vunpack.c.l.b16 %v194
    %v277 = vunpack.c.h.b16 %v194
    %v278 = vunpack.c.l.b16 %v195
    %v279 = vunpack.c.h.b16 %v195
    %v280 = vunpack.c.l.b16 %v196
    %v281 = vunpack.c.h.b16 %v196
    %v282 = vunpack.c.l.b16 %v197
    %v283 = vunpack.c.h.b16 %v197
    %v284 = vunpack.c.l.b16 %v198
    %v285 = vunpack.c.h.b16 %v198
    %v286 = vunpack.c.l.b16 %v199
    %v287 = vunpack.c.h.b16 %v199
    %v288 = vunpack.c.l.b16 %v200
    %v289 = vunpack.c.h.b16 %v200
    %v290 = vunpack.c.l.b16 %v201
    %v291 = vunpack.c.h.b16 %v201
    %v292 = vunpack.c.l.b16 %v202
    %v293 = vunpack.c.h.b16 %v202
    %v294 = vunpack.c.l.b16 %v203
    %v295 = vunpack.c.h.b16 %v203
    %v296 = vunpack.c.l.b16 %v204
    %v297 = vunpack.c.h.b16 %v204
    %v298 = vunpack.c.l.b16 %v205
    %v299 = vunpack.c.h.b16 %v205
    %v300 = vunpack.c.l.b16 %v206
    %v301 = vunpack.c.h.b16 %v206
    %v302 = vunpack.c.l.b16 %v207
    %v303 = vunpack.c.h.b16 %v207
    %v304 = vunpack.c.l.b16 %v208
    %v305 = vunpack.c.h.b16 %v208
    %v306 = vunpack.c.l.b16 %v209
    %v307 = vunpack.c.h.b16 %v209
    %v308 = vunpack.c.l.b16 %v210
    %v309 = vunpack.c.h.b16 %v210
    %v310 = vunpack.c.l.b16 %v211
    %v311 = vunpack.c.h.b16 %v211
    %v312 = vunpack.c.l.b16 %v212
    %v313 = vunpack.c.h.b16 %v212
    %v314 = vunpack.c.l.b16 %v213
    %v315 = vunpack.c.h.b16 %v213
    %v316 = vpack.c.b16 %v254, %v252
    %v317 = vpack.c.b16 %v255, %v253
    %v318 = vpack.c.b16 %v258, %v256
    %v319 = vpack.c.b16 %v259, %v257
    %v320 = vpack.c.b16 %v262, %v260
    %v321 = vpack.c.b16 %v263, %v261
    %v322 = vpack.c.b16 %v266, %v264
    %v323 = vpack.c.b16 %v267, %v265
    %v324 = vpack.c.b16 %v270, %v268
    %v325 = vpack.c.b16 %v271, %v269
    %v326 = vpack.c.b16 %v274, %v272
    %v327 = vpack.c.b16 %v275, %v273
    %v328 = vpack.c.b16 %v278, %v276
    %v329 = vpack.c.b16 %v279, %v277
    %v330 = vpack.c.b16 %v282, %v280
    %v331 = vpack.c.b16 %v283, %v281
    %v332 = vpack.c.b16 %v286, %v284
    %v333 = vpack.c.b16 %v287, %v285
    %v334 = vpack.c.b16 %v290, %v288
    %v335 = vpack.c.b16 %v291, %v289
    %v336 = vpack.c.b16 %v294, %v292
    %v337 = vpack.c.b16 %v295, %v293
    %v338 = vpack.c.b16 %v298, %v296
    %v339 = vpack.c.b16 %v299, %v297
    %v340 = vpack.c.b16 %v302, %v300
    %v341 = vpack.c.b16 %v303, %v301
    %v342 = vpack.c.b16 %v306, %v304
    %v343 = vpack.c.b16 %v307, %v305
    %v344 = vpack.c.b16 %v310, %v308
    %v345 = vpack.c.b16 %v311, %v309
    %v346 = vpack.c.b16 %v314, %v312
    %v347 = vpack.c.b16 %v315, %v313
    %380 = vmatpush.bf16.msra.mxu0 %v330
    %381 = vmatpush.bf16.msra.mxu0 %v328
    %382 = vmatpush.bf16.msra.mxu0 %v326
    %383 = vmatpush.bf16.msra.mxu0 %v324
    %384 = vmatpush.bf16.msra.mxu0 %v322
    %385 = vmatpush.bf16.msra.mxu0 %v320
    %386 = vmatpush.bf16.msra.mxu0 %v318
    %387 = vmatpush.bf16.msra.mxu0 %v316
    %388 = vmatmul.bf16.gmra.mxu0 %v178
    %v389 = vpop.f32.mrf.mxu0
    %v390 = vadd.f32 %v216, %v389
    %v391 = vpop.f32.mrf.mxu0
    %392 = vdwg.mxu0
    %393 = vmatpush.bf16.msra.mxu0 %v346
    %394 = vmatpush.bf16.msra.mxu0 %v344
    %395 = vmatpush.bf16.msra.mxu0 %v342
    %396 = vmatpush.bf16.msra.mxu0 %v340
    %397 = vmatpush.bf16.msra.mxu0 %v338
    %398 = vmatpush.bf16.msra.mxu0 %v336
    %399 = vmatpush.bf16.msra.mxu0 %v334
    %400 = vmatpush.bf16.msra.mxu0 %v332
    %401 = vmatmul.bf16.gmra.mxu0 %v179
    %v402 = vpop.f32.mrf.mxu0
    %v403 = vadd.f32 %v390, %v402
    %v404 = vpop.f32.mrf.mxu0
    %405 = vdwg.mxu0
    %406 = vmatpush.bf16.msra.mxu0 %v331
    %407 = vmatpush.bf16.msra.mxu0 %v329
    %408 = vmatpush.bf16.msra.mxu0 %v327
    %409 = vmatpush.bf16.msra.mxu0 %v325
    %410 = vmatpush.bf16.msra.mxu0 %v323
    %411 = vmatpush.bf16.msra.mxu0 %v321
    %412 = vmatpush.bf16.msra.mxu0 %v319
    %413 = vmatpush.bf16.msra.mxu0 %v317
    %414 = vmatmul.bf16.gmra.mxu0 %v178
    %v415 = vpop.f32.mrf.mxu0
    %v416 = vadd.f32 %v217, %v415
    %v417 = vpop.f32.mrf.mxu0
    %418 = vdwg.mxu0
    %419 = vmatpush.bf16.msra.mxu0 %v347
    %420 = vmatpush.bf16.msra.mxu0 %v345
    %421 = vmatpush.bf16.msra.mxu0 %v343
    %422 = vmatpush.bf16.msra.mxu0 %v341
    %423 = vmatpush.bf16.msra.mxu0 %v339
    %424 = vmatpush.bf16.msra.mxu0 %v337
    %425 = vmatpush.bf16.msra.mxu0 %v335
    %426 = vmatpush.bf16.msra.mxu0 %v333
    %427 = vmatmul.bf16.gmra.mxu0 %v179
    %v428 = vpop.f32.mrf.mxu0
    %v429 = vadd.f32 %v416, %v428
    %v430 = vpop.f32.mrf.mxu0
    %431 = vdwg.mxu0
    %v432 = vmax.f32 %v403, 0.0
    %v433 = vmax.f32 %v429, 0.0
    %v434 = vld [vmem:[#allocation7] sm:$0xff]
    %v435 = vld [vmem:[#allocation7 + $0x8] sm:$0xff]
    %v436 = vld [vmem:[#allocation7 + $0x10] sm:$0xff]
    %v437 = vld [vmem:[#allocation7 + $0x18] sm:$0xff]
    %v438 = vld [vmem:[#allocation7 + $0x20] sm:$0xff]
    %v439 = vld [vmem:[#allocation7 + $0x28] sm:$0xff]
    %v440 = vld [vmem:[#allocation7 + $0x30] sm:$0xff]
    %v441 = vld [vmem:[#allocation7 + $0x38] sm:$0xff]
    %v442 = vld [vmem:[#allocation7 + $0x40] sm:$0xff]
    %v443 = vld [vmem:[#allocation7 + $0x48] sm:$0xff]
    %v444 = vld [vmem:[#allocation7 + $0x50] sm:$0xff]
    %v445 = vld [vmem:[#allocation7 + $0x58] sm:$0xff]
    %v446 = vld [vmem:[#allocation7 + $0x60] sm:$0xff]
    %v447 = vld [vmem:[#allocation7 + $0x68] sm:$0xff]
    %v448 = vld [vmem:[#allocation7 + $0x70] sm:$0xff]
    %v449 = vld [vmem:[#allocation7 + $0x78] sm:$0xff]
    %v450 = vld [vmem:[#allocation7 + $0x80] sm:$0xff]
    %v451 = vld [vmem:[#allocation7 + $0x88] sm:$0xff]
    %v452 = vld [vmem:[#allocation7 + $0x90] sm:$0xff]
    %v453 = vld [vmem:[#allocation7 + $0x98] sm:$0xff]
    %v454 = vld [vmem:[#allocation7 + $0xa0] sm:$0xff]
    %v455 = vld [vmem:[#allocation7 + $0xa8] sm:$0xff]
    %v456 = vld [vmem:[#allocation7 + $0xb0] sm:$0xff]
    %v457 = vld [vmem:[#allocation7 + $0xb8] sm:$0xff]
    %v458 = vld [vmem:[#allocation7 + $0xc0] sm:$0xff]
    %v459 = vld [vmem:[#allocation7 + $0xc8] sm:$0xff]
    %v460 = vld [vmem:[#allocation7 + $0xd0] sm:$0xff]
    %v461 = vld [vmem:[#allocation7 + $0xd8] sm:$0xff]
    %v462 = vld [vmem:[#allocation7 + $0xe0] sm:$0xff]
    %v463 = vld [vmem:[#allocation7 + $0xe8] sm:$0xff]
    %v464 = vld [vmem:[#allocation7 + $0xf0] sm:$0xff]
    %v465 = vld [vmem:[#allocation7 + $0xf8] sm:$0xff]
    %v466 = vld [vmem:[%s6] sm:$0x3]
    %v468 = vperm.slane %v466, 0
    %v469 = vperm.slane %v466, 1
    %v504 = vunpack.c.l.b16 %v434
    %v505 = vunpack.c.h.b16 %v434
    %v506 = vunpack.c.l.b16 %v435
    %v507 = vunpack.c.h.b16 %v435
    %v508 = vunpack.c.l.b16 %v436
    %v509 = vunpack.c.h.b16 %v436
    %v510 = vunpack.c.l.b16 %v437
    %v511 = vunpack.c.h.b16 %v437
    %v512 = vunpack.c.l.b16 %v438
    %v513 = vunpack.c.h.b16 %v438
    %v514 = vunpack.c.l.b16 %v439
    %v515 = vunpack.c.h.b16 %v439
    %v516 = vunpack.c.l.b16 %v440
    %v517 = vunpack.c.h.b16 %v440
    %v518 = vunpack.c.l.b16 %v441
    %v519 = vunpack.c.h.b16 %v441
    %v520 = vunpack.c.l.b16 %v442
    %v521 = vunpack.c.h.b16 %v442
    %v522 = vunpack.c.l.b16 %v443
    %v523 = vunpack.c.h.b16 %v443
    %v524 = vunpack.c.l.b16 %v444
    %v525 = vunpack.c.h.b16 %v444
    %v526 = vunpack.c.l.b16 %v445
    %v527 = vunpack.c.h.b16 %v445
    %v528 = vunpack.c.l.b16 %v446
    %v529 = vunpack.c.h.b16 %v446
    %v530 = vunpack.c.l.b16 %v447
    %v531 = vunpack.c.h.b16 %v447
    %v532 = vunpack.c.l.b16 %v448
    %v533 = vunpack.c.h.b16 %v448
    %v534 = vunpack.c.l.b16 %v449
    %v535 = vunpack.c.h.b16 %v449
    %v536 = vunpack.c.l.b16 %v450
    %v537 = vunpack.c.h.b16 %v450
    %v538 = vunpack.c.l.b16 %v451
    %v539 = vunpack.c.h.b16 %v451
    %v540 = vunpack.c.l.b16 %v452
    %v541 = vunpack.c.h.b16 %v452
    %v542 = vunpack.c.l.b16 %v453
    %v543 = vunpack.c.h.b16 %v453
    %v544 = vunpack.c.l.b16 %v454
    %v545 = vunpack.c.h.b16 %v454
    %v546 = vunpack.c.l.b16 %v455
    %v547 = vunpack.c.h.b16 %v455
    %v548 = vunpack.c.l.b16 %v456
    %v549 = vunpack.c.h.b16 %v456
    %v550 = vunpack.c.l.b16 %v457
    %v551 = vunpack.c.h.b16 %v457
    %v552 = vunpack.c.l.b16 %v458
    %v553 = vunpack.c.h.b16 %v458
    %v554 = vunpack.c.l.b16 %v459
    %v555 = vunpack.c.h.b16 %v459
    %v556 = vunpack.c.l.b16 %v460
    %v557 = vunpack.c.h.b16 %v460
    %v558 = vunpack.c.l.b16 %v461
    %v559 = vunpack.c.h.b16 %v461
    %v560 = vunpack.c.l.b16 %v462
    %v561 = vunpack.c.h.b16 %v462
    %v562 = vunpack.c.l.b16 %v463
    %v563 = vunpack.c.h.b16 %v463
    %v564 = vunpack.c.l.b16 %v464
    %v565 = vunpack.c.h.b16 %v464
    %v566 = vunpack.c.l.b16 %v465
    %v567 = vunpack.c.h.b16 %v465
    %v568 = vpack.c.b16 %v506, %v504
    %v569 = vpack.c.b16 %v507, %v505
    %v570 = vpack.c.b16 %v510, %v508
    %v571 = vpack.c.b16 %v511, %v509
    %v572 = vpack.c.b16 %v514, %v512
    %v573 = vpack.c.b16 %v515, %v513
    %v574 = vpack.c.b16 %v518, %v516
    %v575 = vpack.c.b16 %v519, %v517
    %v576 = vpack.c.b16 %v522, %v520
    %v577 = vpack.c.b16 %v523, %v521
    %v578 = vpack.c.b16 %v526, %v524
    %v579 = vpack.c.b16 %v527, %v525
    %v580 = vpack.c.b16 %v530, %v528
    %v581 = vpack.c.b16 %v531, %v529
    %v582 = vpack.c.b16 %v534, %v532
    %v583 = vpack.c.b16 %v535, %v533
    %v584 = vpack.c.b16 %v538, %v536
    %v585 = vpack.c.b16 %v539, %v537
    %v586 = vpack.c.b16 %v542, %v540
    %v587 = vpack.c.b16 %v543, %v541
    %v588 = vpack.c.b16 %v546, %v544
    %v589 = vpack.c.b16 %v547, %v545
    %v590 = vpack.c.b16 %v550, %v548
    %v591 = vpack.c.b16 %v551, %v549
    %v592 = vpack.c.b16 %v554, %v552
    %v593 = vpack.c.b16 %v555, %v553
    %v594 = vpack.c.b16 %v558, %v556
    %v595 = vpack.c.b16 %v559, %v557
    %v596 = vpack.c.b16 %v562, %v560
    %v597 = vpack.c.b16 %v563, %v561
    %v598 = vpack.c.b16 %v566, %v564
    %v599 = vpack.c.b16 %v567, %v565
    %632 = vmatpush.bf16.msra.mxu0 %v582
    %633 = vmatpush.bf16.msra.mxu0 %v580
    %634 = vmatpush.bf16.msra.mxu0 %v578
    %635 = vmatpush.bf16.msra.mxu0 %v576
    %636 = vmatpush.bf16.msra.mxu0 %v574
    %637 = vmatpush.bf16.msra.mxu0 %v572
    %638 = vmatpush.bf16.msra.mxu0 %v570
    %639 = vmatpush.bf16.msra.mxu0 %v568
    %640 = vmatmul.bf16.gmra.mxu0 %v180
    %v641 = vpop.f32.mrf.mxu0
    %v642 = vadd.f32 %v468, %v641
    %v643 = vpop.f32.mrf.mxu0
    %644 = vdwg.mxu0
    %645 = vmatpush.bf16.msra.mxu0 %v598
    %646 = vmatpush.bf16.msra.mxu0 %v596
    %647 = vmatpush.bf16.msra.mxu0 %v594
    %648 = vmatpush.bf16.msra.mxu0 %v592
    %649 = vmatpush.bf16.msra.mxu0 %v590
    %650 = vmatpush.bf16.msra.mxu0 %v588
    %651 = vmatpush.bf16.msra.mxu0 %v586
    %652 = vmatpush.bf16.msra.mxu0 %v584
    %653 = vmatmul.bf16.gmra.mxu0 %v181
    %v654 = vpop.f32.mrf.mxu0
    %v655 = vadd.f32 %v642, %v654
    %v656 = vpop.f32.mrf.mxu0
    %657 = vdwg.mxu0
    %658 = vmatpush.bf16.msra.mxu0 %v583
    %659 = vmatpush.bf16.msra.mxu0 %v581
    %660 = vmatpush.bf16.msra.mxu0 %v579
    %661 = vmatpush.bf16.msra.mxu0 %v577
    %662 = vmatpush.bf16.msra.mxu0 %v575
    %663 = vmatpush.bf16.msra.mxu0 %v573
    %664 = vmatpush.bf16.msra.mxu0 %v571
    %665 = vmatpush.bf16.msra.mxu0 %v569
    %666 = vmatmul.bf16.gmra.mxu0 %v180
    %v667 = vpop.f32.mrf.mxu0
    %v668 = vadd.f32 %v469, %v667
    %v669 = vpop.f32.mrf.mxu0
    %670 = vdwg.mxu0
    %671 = vmatpush.bf16.msra.mxu0 %v599
    %672 = vmatpush.bf16.msra.mxu0 %v597
    %673 = vmatpush.bf16.msra.mxu0 %v595
    %674 = vmatpush.bf16.msra.mxu0 %v593
    %675 = vmatpush.bf16.msra.mxu0 %v591
    %676 = vmatpush.bf16.msra.mxu0 %v589
    %677 = vmatpush.bf16.msra.mxu0 %v587
    %678 = vmatpush.bf16.msra.mxu0 %v585
    %679 = vmatmul.bf16.gmra.mxu0 %v181
    %v680 = vpop.f32.mrf.mxu0
    %v681 = vadd.f32 %v668, %v680
    %v682 = vpop.f32.mrf.mxu0
    %683 = vdwg.mxu0
    %v684 = vmax.f32 %v655, 0.0
    %v685 = vmax.f32 %v681, 0.0
    %v686 = vpack.c.bf16 %v432, %v432
    %v687 = vpack.c.bf16 %v433, %v433
    %v688 = vld [vmem:[%s7] sm:$0xf]
    %v689 = vld [vmem:[%s7 + $0x4] sm:$0xf]
    %v690 = vld [vmem:[%s7 + $0x8] sm:$0xf]
    %v691 = vld [vmem:[%s7 + $0xc] sm:$0xf]
    %v692 = vld [vmem:[%s7 + $0x10] sm:$0xf]
    %v693 = vld [vmem:[%s7 + $0x14] sm:$0xf]
    %v694 = vld [vmem:[%s7 + $0x18] sm:$0xf]
    %v695 = vld [vmem:[%s7 + $0x1c] sm:$0xf]
    %v696 = vld [vmem:[%s7 + $0x20] sm:$0xf]
    %v697 = vld [vmem:[%s7 + $0x24] sm:$0xf]
    %v698 = vld [vmem:[%s7 + $0x28] sm:$0xf]
    %v699 = vld [vmem:[%s7 + $0x2c] sm:$0xf]
    %v700 = vld [vmem:[%s7 + $0x30] sm:$0xf]
    %v701 = vld [vmem:[%s7 + $0x34] sm:$0xf]
    %v702 = vld [vmem:[%s7 + $0x38] sm:$0xf]
    %v703 = vld [vmem:[%s7 + $0x3c] sm:$0xf]
    %v704 = vld [vmem:[%s7 + $0x40] sm:$0xf]
    %v705 = vld [vmem:[%s7 + $0x44] sm:$0xf]
    %v706 = vld [vmem:[%s7 + $0x48] sm:$0xf]
    %v707 = vld [vmem:[%s7 + $0x4c] sm:$0xf]
    %v708 = vld [vmem:[%s7 + $0x50] sm:$0xf]
    %v709 = vld [vmem:[%s7 + $0x54] sm:$0xf]
    %v710 = vld [vmem:[%s7 + $0x58] sm:$0xf]
    %v711 = vld [vmem:[%s7 + $0x5c] sm:$0xf]
    %v712 = vld [vmem:[%s7 + $0x60] sm:$0xf]
    %v713 = vld [vmem:[%s7 + $0x64] sm:$0xf]
    %v714 = vld [vmem:[%s7 + $0x68] sm:$0xf]
    %v715 = vld [vmem:[%s7 + $0x6c] sm:$0xf]
    %v716 = vld [vmem:[%s7 + $0x70] sm:$0xf]
    %v717 = vld [vmem:[%s7 + $0x74] sm:$0xf]
    %v718 = vld [vmem:[%s7 + $0x78] sm:$0xf]
    %v719 = vld [vmem:[%s7 + $0x7c] sm:$0xf]
    %v720 = vpack.c.bf16 %v684, %v684
    %v721 = vpack.c.bf16 %v685, %v685
    %v722 = vld [vmem:[%s8] sm:$0xf]
    %v723 = vld [vmem:[%s8 + $0x4] sm:$0xf]
    %v724 = vld [vmem:[%s8 + $0x8] sm:$0xf]
    %v725 = vld [vmem:[%s8 + $0xc] sm:$0xf]
    %v726 = vld [vmem:[%s8 + $0x10] sm:$0xf]
    %v727 = vld [vmem:[%s8 + $0x14] sm:$0xf]
    %v728 = vld [vmem:[%s8 + $0x18] sm:$0xf]
    %v729 = vld [vmem:[%s8 + $0x1c] sm:$0xf]
    %v730 = vld [vmem:[%s8 + $0x20] sm:$0xf]
    %v731 = vld [vmem:[%s8 + $0x24] sm:$0xf]
    %v732 = vld [vmem:[%s8 + $0x28] sm:$0xf]
    %v733 = vld [vmem:[%s8 + $0x2c] sm:$0xf]
    %v734 = vld [vmem:[%s8 + $0x30] sm:$0xf]
    %v735 = vld [vmem:[%s8 + $0x34] sm:$0xf]
    %v736 = vld [vmem:[%s8 + $0x38] sm:$0xf]
    %v737 = vld [vmem:[%s8 + $0x3c] sm:$0xf]
    %v738 = vld [vmem:[%s8 + $0x40] sm:$0xf]
    %v739 = vld [vmem:[%s8 + $0x44] sm:$0xf]
    %v740 = vld [vmem:[%s8 + $0x48] sm:$0xf]
    %v741 = vld [vmem:[%s8 + $0x4c] sm:$0xf]
    %v742 = vld [vmem:[%s8 + $0x50] sm:$0xf]
    %v743 = vld [vmem:[%s8 + $0x54] sm:$0xf]
    %v744 = vld [vmem:[%s8 + $0x58] sm:$0xf]
    %v745 = vld [vmem:[%s8 + $0x5c] sm:$0xf]
    %v746 = vld [vmem:[%s8 + $0x60] sm:$0xf]
    %v747 = vld [vmem:[%s8 + $0x64] sm:$0xf]
    %v748 = vld [vmem:[%s8 + $0x68] sm:$0xf]
    %v749 = vld [vmem:[%s8 + $0x6c] sm:$0xf]
    %v750 = vld [vmem:[%s8 + $0x70] sm:$0xf]
    %v751 = vld [vmem:[%s8 + $0x74] sm:$0xf]
    %v752 = vld [vmem:[%s8 + $0x78] sm:$0xf]
    %v753 = vld [vmem:[%s8 + $0x7c] sm:$0xf]
    %v786 = vunpack.c.l.b16 %v722
    %v787 = vunpack.c.l.b16 %v723
    %v788 = vunpack.c.l.b16 %v724
    %v789 = vunpack.c.l.b16 %v725
    %v790 = vunpack.c.l.b16 %v726
    %v791 = vunpack.c.l.b16 %v727
    %v792 = vunpack.c.l.b16 %v728
    %v793 = vunpack.c.l.b16 %v729
    %v794 = vunpack.c.l.b16 %v730
    %v795 = vunpack.c.l.b16 %v731
    %v796 = vunpack.c.l.b16 %v732
    %v797 = vunpack.c.l.b16 %v733
    %v798 = vunpack.c.l.b16 %v734
    %v799 = vunpack.c.l.b16 %v735
    %v800 = vunpack.c.l.b16 %v736
    %v801 = vunpack.c.l.b16 %v737
    %v802 = vunpack.c.l.b16 %v738
    %v803 = vunpack.c.l.b16 %v739
    %v804 = vunpack.c.l.b16 %v740
    %v805 = vunpack.c.l.b16 %v741
    %v806 = vunpack.c.l.b16 %v742
    %v807 = vunpack.c.l.b16 %v743
    %v808 = vunpack.c.l.b16 %v744
    %v809 = vunpack.c.l.b16 %v745
    %v810 = vunpack.c.l.b16 %v746
    %v811 = vunpack.c.l.b16 %v747
    %v812 = vunpack.c.l.b16 %v748
    %v813 = vunpack.c.l.b16 %v749
    %v814 = vunpack.c.l.b16 %v750
    %v815 = vunpack.c.l.b16 %v751
    %v816 = vunpack.c.l.b16 %v752
    %v817 = vunpack.c.l.b16 %v753
    %v818 = vpack.c.b16 %v787, %v786
    %v819 = vpack.c.b16 %v789, %v788
    %v820 = vpack.c.b16 %v791, %v790
    %v821 = vpack.c.b16 %v793, %v792
    %v822 = vpack.c.b16 %v795, %v794
    %v823 = vpack.c.b16 %v797, %v796
    %v824 = vpack.c.b16 %v799, %v798
    %v825 = vpack.c.b16 %v801, %v800
    %v826 = vpack.c.b16 %v803, %v802
    %v827 = vpack.c.b16 %v805, %v804
    %v828 = vpack.c.b16 %v807, %v806
    %v829 = vpack.c.b16 %v809, %v808
    %v830 = vpack.c.b16 %v811, %v810
    %v831 = vpack.c.b16 %v813, %v812
    %v832 = vpack.c.b16 %v815, %v814
    %v833 = vpack.c.b16 %v817, %v816
    %850 = vmatpush.bf16.msra.mxu0 %v825
    %851 = vmatpush.bf16.msra.mxu0 %v824
    %852 = vmatpush.bf16.msra.mxu0 %v823
    %853 = vmatpush.bf16.msra.mxu0 %v822
    %854 = vmatpush.bf16.msra.mxu0 %v821
    %855 = vmatpush.bf16.msra.mxu0 %v820
    %856 = vmatpush.bf16.msra.mxu0 %v819
    %857 = vmatpush.bf16.msra.mxu0 %v818
    %858 = vmatmul.bf16.gmra.mxu0 %v720
    %v859 = vpop.f32.mrf.mxu0
    %v860 = vadd.f32 0.0, %v859
    %v861 = vpop.f32.mrf.mxu0
    %862 = vdwg.mxu0
    %863 = vmatpush.bf16.msra.mxu0 %v833
    %864 = vmatpush.bf16.msra.mxu0 %v832
    %865 = vmatpush.bf16.msra.mxu0 %v831
    %866 = vmatpush.bf16.msra.mxu0 %v830
    %867 = vmatpush.bf16.msra.mxu0 %v829
    %868 = vmatpush.bf16.msra.mxu0 %v828
    %869 = vmatpush.bf16.msra.mxu0 %v827
    %870 = vmatpush.bf16.msra.mxu0 %v826
    %871 = vmatmul.bf16.gmra.mxu0 %v721
    %v872 = vpop.f32.mrf.mxu0
    %v873 = vadd.f32 %v860, %v872
    %v874 = vpop.f32.mrf.mxu0
    %875 = vdwg.mxu0
    %v908 = vunpack.c.l.b16 %v688
    %v909 = vunpack.c.l.b16 %v689
    %v910 = vunpack.c.l.b16 %v690
    %v911 = vunpack.c.l.b16 %v691
    %v912 = vunpack.c.l.b16 %v692
    %v913 = vunpack.c.l.b16 %v693
    %v914 = vunpack.c.l.b16 %v694
    %v915 = vunpack.c.l.b16 %v695
    %v916 = vunpack.c.l.b16 %v696
    %v917 = vunpack.c.l.b16 %v697
    %v918 = vunpack.c.l.b16 %v698
    %v919 = vunpack.c.l.b16 %v699
    %v920 = vunpack.c.l.b16 %v700
    %v921 = vunpack.c.l.b16 %v701
    %v922 = vunpack.c.l.b16 %v702
    %v923 = vunpack.c.l.b16 %v703
    %v924 = vunpack.c.l.b16 %v704
    %v925 = vunpack.c.l.b16 %v705
    %v926 = vunpack.c.l.b16 %v706
    %v927 = vunpack.c.l.b16 %v707
    %v928 = vunpack.c.l.b16 %v708
    %v929 = vunpack.c.l.b16 %v709
    %v930 = vunpack.c.l.b16 %v710
    %v931 = vunpack.c.l.b16 %v711
    %v932 = vunpack.c.l.b16 %v712
    %v933 = vunpack.c.l.b16 %v713
    %v934 = vunpack.c.l.b16 %v714
    %v935 = vunpack.c.l.b16 %v715
    %v936 = vunpack.c.l.b16 %v716
    %v937 = vunpack.c.l.b16 %v717
    %v938 = vunpack.c.l.b16 %v718
    %v939 = vunpack.c.l.b16 %v719
    %v940 = vpack.c.b16 %v909, %v908
    %v941 = vpack.c.b16 %v911, %v910
    %v942 = vpack.c.b16 %v913, %v912
    %v943 = vpack.c.b16 %v915, %v914
    %v944 = vpack.c.b16 %v917, %v916
    %v945 = vpack.c.b16 %v919, %v918
    %v946 = vpack.c.b16 %v921, %v920
    %v947 = vpack.c.b16 %v923, %v922
    %v948 = vpack.c.b16 %v925, %v924
    %v949 = vpack.c.b16 %v927, %v926
    %v950 = vpack.c.b16 %v929, %v928
    %v951 = vpack.c.b16 %v931, %v930
    %v952 = vpack.c.b16 %v933, %v932
    %v953 = vpack.c.b16 %v935, %v934
    %v954 = vpack.c.b16 %v937, %v936
    %v955 = vpack.c.b16 %v939, %v938
    %972 = vmatpush.bf16.msra.mxu0 %v947
    %973 = vmatpush.bf16.msra.mxu0 %v946
    %974 = vmatpush.bf16.msra.mxu0 %v945
    %975 = vmatpush.bf16.msra.mxu0 %v944
    %976 = vmatpush.bf16.msra.mxu0 %v943
    %977 = vmatpush.bf16.msra.mxu0 %v942
    %978 = vmatpush.bf16.msra.mxu0 %v941
    %979 = vmatpush.bf16.msra.mxu0 %v940
    %980 = vmatmul.bf16.gmra.mxu0 %v686
    %v981 = vpop.f32.mrf.mxu0
    %v982 = vadd.f32 %v873, %v981
    %v983 = vpop.f32.mrf.mxu0
    %984 = vdwg.mxu0
    %985 = vmatpush.bf16.msra.mxu0 %v955
    %986 = vmatpush.bf16.msra.mxu0 %v954
    %987 = vmatpush.bf16.msra.mxu0 %v953
    %988 = vmatpush.bf16.msra.mxu0 %v952
    %989 = vmatpush.bf16.msra.mxu0 %v951
    %990 = vmatpush.bf16.msra.mxu0 %v950
    %991 = vmatpush.bf16.msra.mxu0 %v949
    %992 = vmatpush.bf16.msra.mxu0 %v948
    %993 = vmatmul.bf16.gmra.mxu0 %v687
    %v994 = vpop.f32.mrf.mxu0
    %v995 = vadd.f32 %v982, %v994
    %v996 = vpop.f32.mrf.mxu0
    %997 = vdwg.mxu0
    %v998 = vld [vmem:[%s9] sm:$0x1]
    %v1000 = vperm.slane %v998, 0
    %v1002 = vadd.f32 %v995, %v1000
    %vm1003 = vcmask 64512
    %1004 = vst.msk [vmem:[#allocation8] sm:$0xff] %vm1003, %v1002
    // Predicated region
    $region54: #{tpu_custom_call.1} parent=1 // pred_check
      _
    $region55: #{tpu_custom_call.1} parent=1 // pred_check_branch
      %1006 = sbr.rel (0) target = $region57
    $region56: #{tpu_custom_call.1} parent=1 // pred_region
      %1008 = vsyncadd [#allocation4], 0
      %s1010 = sshll.u32 [#allocation8], 4
      %s1011 = int_to_ptr.vmem [resolvable:$true] %s1010
      %s1012 = sshll.u32 %s10, 4
      %s1013 = int_to_ptr.hbm [resolvable:$true] %s1012
      %1015 = dma.vmem_to_hbm [thread:$0]  %s1011, 128, %s1013, [#allocation4]
    $region57: #{tpu_custom_call.1} parent=1 // pred_fallthru
      _
    // Predicated region
    $region58: #{tpu_custom_call.1} parent=1 // pred_check
      _
    $region59: #{tpu_custom_call.1} parent=1 // pred_check_branch
      %1017 = sbr.rel (0) target = $region61
    $region60: #{tpu_custom_call.1} parent=1 // pred_region
      %1019 = dma.done [#allocation4], 128
    $region61: #{tpu_custom_call.1} parent=1 // pred_fallthru
      _
    %1020 = vsyncpa [#allocation3], 1
    %1021 = vsyncpa [#allocation6], 1
    %1022 = vsyncpa [#allocation4], 1

</llo_original>
